<compile_context>
chip_gen: v5e
topology: v5e:2x2
jax: 0.10.0
libtpu: 0.0.40
codegen_flags: <defaults>
</compile_context>

<pallas_src>
import functools
import math

import jax
import jax.numpy as jnp
from jax import lax
from jax.experimental import pallas as pl
from jax.experimental.pallas import tpu as pltpu


def _cdiv(a, b):
    return -(-a // b)


def _int_pow(x, p):
    """x**p for positive integer p using multiplies only (exact module semantics)."""
    result = None
    base = x
    while p > 0:
        if p & 1:
            result = base if result is None else result * base
        base = base * base
        p >>= 1
    return result


def _lp_inverse_norm(x_f32, power, axis):
    """1 / ||x||_p along `axis` (keepdims=True), computed in float32."""
    if power == 2:
        s = jnp.sum(x_f32 * x_f32, axis=axis, keepdims=True)
        return lax.rsqrt(s)                       # EUP, once per output column
    if isinstance(power, int) and power > 0:
        xp = _int_pow(x_f32, power)               # VALU multiplies only
    else:
        xp = jnp.power(x_f32, power)              # non-integer power fallback
    s = jnp.sum(xp, axis=axis, keepdims=True)
    # NaN for negative s matches torch's `s ** (1/p)` behavior.
    return jnp.exp(jnp.log(s) * (-1.0 / power))


def _normalize_kernel_mid(x_ref, o_ref, *, power):
    # Block is (PB, C, TM); the L_p reduction runs over C (axis=1, sublanes).
    x_raw = x_ref[...]
    inv = _lp_inverse_norm(x_raw.astype(jnp.float32), power, axis=1)
    # Keep the writeback multiply in the input dtype (packed VPU for bf16).
    o_ref[...] = (x_raw * inv.astype(x_raw.dtype)).astype(o_ref.dtype)


def _normalize_kernel_last(x_ref, o_ref, *, power):
    # Block is (TP, C) with C on lanes; reduce along the lane axis.
    x_raw = x_ref[...]
    inv = _lp_inverse_norm(x_raw.astype(jnp.float32), power, axis=-1)
    o_ref[...] = (x_raw * inv.astype(x_raw.dtype)).astype(o_ref.dtype)


def _vmem_params():
    """(tile-sizing budget, scoped VMEM limit) derived from this chip's VMEM."""
    try:
        cap = int(pltpu.get_tpu_info().vmem_capacity_bytes)
    except Exception:  # pragma: no cover - conservative (v7x-sized) fallback
        cap = 64 << 20
    budget = min(int(cap * 0.55), 48 << 20)           # v5e/v6e: 48 MiB, v7x: ~35 MiB
    limit = min(int(cap * 0.85), budget + (16 << 20))
    return budget, limit


_SPLIT_BYTES = 512 * 1024   # only force >=2 grid points (megacore) above this


def normalize(x, power=2, dim=1):
    """Pallas equivalent of Normalize(power).forward(x, dim)."""
    shape = x.shape
    dim = dim % len(shape)
    C = shape[dim]
    pre = math.prod(shape[:dim])
    post = math.prod(shape[dim + 1:])

    itemsize = x.dtype.itemsize
    budget, vmem_limit = _vmem_params()
    # Per-element VMEM cost: double-buffered in + out, plus ~2 f32 temporaries.
    bytes_per_elem = 4 * itemsize + 8
    total_bytes = x.size * itemsize

    cost = pl.CostEstimate(flops=3 * x.size,
                           transcendentals=pre * post,
                           bytes_accessed=2 * total_bytes)

    if post == 1:
        # ---- dim is the last axis: lane-dense (pre, C) layout ----------------
        x2 = x.reshape(pre, C)
        per_row = max(C * bytes_per_elem, 1)
        tp = max(8, (budget // per_row) // 8 * 8)
        if pre < 8 or tp >= pre:
            tp = pre
        # Megacore (v7x): keep both TensorCores busy when there is real work.
        if _cdiv(pre, tp) == 1 and pre >= 16 and total_bytes >= _SPLIT_BYTES:
            tp = (_cdiv(pre, 2) + 7) // 8 * 8

        kernel = functools.partial(_normalize_kernel_last, power=power)
        out = pl.pallas_call(
            kernel,
            out_shape=jax.ShapeDtypeStruct((pre, C), x.dtype),
            grid_spec=pltpu.PrefetchScalarGridSpec(
                num_scalar_prefetch=0,
                grid=(_cdiv(pre, tp),),
                in_specs=[pl.BlockSpec((tp, C), lambda i: (i, 0))],
                out_specs=pl.BlockSpec((tp, C), lambda i: (i, 0)),
            ),
            compiler_params=pltpu.CompilerParams(
                dimension_semantics=("parallel",),
                vmem_limit_bytes=vmem_limit),
            cost_estimate=cost,
        )(x2)
        return out.reshape(shape)

    # ---- general case: (pre, C, post) view, reduce over the sublane axis -----
    # TODO(synk): when 1 < post < 128 the output lane width is post (<128) and
    # stores are partially masked; a lane-dense repack for that case is not done.
    x3 = x.reshape(pre, C, post)
    per_lane = max(C * bytes_per_elem, 1)

    if post * per_lane <= budget:
        tm = post                                   # full post extent per block
        pb = max(1, min(pre, budget // max(post * per_lane, 1)))
    else:
        pb = 1
        tm = max(128, (budget // per_lane) // 128 * 128)
        if tm >= post:
            tm = post
        # TODO(synk): very large C would benefit from a two-pass grid reduction
        # instead of relying on vmem_limit headroom with a single resident block.

    pre_blocks = _cdiv(pre, pb)
    lane_blocks = _cdiv(post, tm)
    # Megacore (v7x): avoid a single-point grid when there is real work.
    if pre_blocks * lane_blocks == 1 and total_bytes >= _SPLIT_BYTES:
        if pre >= 2:
            pb = _cdiv(pre, 2)
        elif post >= 256:
            tm = (_cdiv(post, 2) + 127) // 128 * 128
        pre_blocks = _cdiv(pre, pb)
        lane_blocks = _cdiv(post, tm)

    kernel = functools.partial(_normalize_kernel_mid, power=power)
    out = pl.pallas_call(
        kernel,
        out_shape=jax.ShapeDtypeStruct((pre, C, post), x.dtype),
        grid_spec=pltpu.PrefetchScalarGridSpec(
            num_scalar_prefetch=0,
            grid=(pre_blocks, lane_blocks),
            in_specs=[pl.BlockSpec((pb, C, tm), lambda n, i: (n, 0, i))],
            out_specs=pl.BlockSpec((pb, C, tm), lambda n, i: (n, 0, i)),
        ),
        compiler_params=pltpu.CompilerParams(
            dimension_semantics=("parallel", "parallel"),
            vmem_limit_bytes=vmem_limit),
        cost_estimate=cost,
    )(x3)
    return out.reshape(shape)


if __name__ == "__main__":
    key = jax.random.PRNGKey(0)

    # Default use case: NCHW conv features, normalize over channels (dim=1).
    x = jax.random.normal(key, (2, 4, 16, 16), dtype=jnp.float32)
    out = jax.block_until_ready(normalize(x, power=2, dim=1))
    norm = jnp.sqrt(jnp.sum(x * x, axis=1, keepdims=True))
    assert out.shape == x.shape and out.dtype == x.dtype
    assert jnp.max(jnp.abs(out - x / norm)) < 1e-5

    # Integer power != 2, middle dim (positive inputs keep raw-pow NaN-free,
    # matching torch semantics).
    xp = jnp.abs(jax.random.normal(jax.random.PRNGKey(1), (2, 4, 16, 16),
                                   dtype=jnp.float32)) + 0.1
    out3 = jax.block_until_ready(normalize(xp, power=3, dim=2))
    norm3 = jnp.power(jnp.sum(jnp.power(xp, 3), axis=2, keepdims=True), 1.0 / 3.0)
    assert jnp.max(jnp.abs(out3 - xp / norm3)) < 1e-4

    # Last-dim path (post == 1): lane-dense (pre, C) layout.
    out_last = jax.block_until_ready(normalize(x, power=2, dim=3))
    norm_last = jnp.sqrt(jnp.sum(x * x, axis=3, keepdims=True))
    assert jnp.max(jnp.abs(out_last - x / norm_last)) < 1e-5

    print("KERNEL_OK")
</pallas_src>

<mosaic_0001>
module attributes {stable_mosaic.version = 11 : i64} {
  func.func @_normalize_kernel_mid(%arg0: i32, %arg1: i32, %arg2: memref<2x4x256xf32, #tpu.memory_space<vmem>>, %arg3: memref<2x4x256xf32, #tpu.memory_space<vmem>>) attributes {dimension_semantics = [#tpu.dimension_semantics<parallel>, #tpu.dimension_semantics<parallel>], iteration_bounds = array<i64: 1, 1>, scalar_prefetch = 0 : i64, scratch_operands = 0 : i64, tpu.core_type = #tpu.core_type<tc>, window_params = [{transform_indices = @transform_0, window_bounds = array<i64: 2, 4, 256>}, {transform_indices = @transform_1, window_bounds = array<i64: 2, 4, 256>}]} {
    %c0 = arith.constant 0 : index
    %c0_0 = arith.constant 0 : index
    %c0_1 = arith.constant 0 : index
    %0 = vector.load %arg2[%c0, %c0_0, %c0_1] : memref<2x4x256xf32, #tpu.memory_space<vmem>>, vector<2x4x256xf32>
    %1 = arith.mulf %0, %0 : vector<2x4x256xf32>
    %cst = arith.constant dense<0.000000e+00> : vector<2x256xf32>
    %2 = vector.multi_reduction <add>, %1, %cst [1] : vector<2x4x256xf32> to vector<2x256xf32>
    %3 = vector.shape_cast %2 : vector<2x256xf32> to vector<2x1x256xf32>
    %4 = math.rsqrt %3 : vector<2x1x256xf32>
    %5 = vector.broadcast %4 : vector<2x1x256xf32> to vector<2x4x256xf32>
    %6 = arith.mulf %0, %5 : vector<2x4x256xf32>
    %c0_2 = arith.constant 0 : index
    %c0_3 = arith.constant 0 : index
    %c0_4 = arith.constant 0 : index
    %7 = vector.load %arg3[%c0_2, %c0_3, %c0_4] : memref<2x4x256xf32, #tpu.memory_space<vmem>>, vector<2x4x256xf32>
    tpu.vector_store %arg3[%c0_2, %c0_3, %c0_4], %6 {strides = array<i32>} : memref<2x4x256xf32, #tpu.memory_space<vmem>>, vector<2x4x256xf32>,
    return
  }
  func.func @transform_0(%arg0: i32, %arg1: i32) -> (i32, i32, i32) {
    %c0_i32 = arith.constant 0 : i32
    %c0_i32_0 = arith.constant 0 : i32
    return %arg0, %c0_i32, %arg1 : i32, i32, i32
  }
  func.func @transform_1(%arg0: i32, %arg1: i32) -> (i32, i32, i32) {
    %c0_i32 = arith.constant 0 : i32
    %c0_i32_0 = arith.constant 0 : i32
    return %arg0, %c0_i32, %arg1 : i32, i32, i32
  }
}

</mosaic_0001>

<llo_original>
// kernel: tpu_custom_call.1
$region0: #{tpu_custom_call.1}
  #allocation0 [shape = 'u32[]', space=smem, size = 0x4, offset = 0x4, fixed_abs, tag = 'smem constant byte address 0x4 - core index']
  #allocation1 [shape = 'u32[72,128]{1,0:T(1,128)}', space=vmem, size = 0x9000, scoped, tag = 'internal scratch']
  %s0 = inlined_call_operand.hbm [shape: f32[2,4,256], index: 0, kind: input, shape index: {}]
  %s1 = inlined_call_operand.hbm [shape: f32[2,4,256], index: 1, kind: output, shape index: {}]
  %s2 = sld [smem:[#allocation0]]
  $region18: #{tpu_custom_call.1} parent=0
    _
  %s4 = ssub.s32 1, %s2
  %s5 = scalar_select 0, %s4, %s2
  $region1: #{tpu_custom_call.1} parent=0
    #allocation2 [shape = 'u8[8192]{0}', space=vmem, size = 0x2000, scoped, tag = 'input window, operand 0, single buffered']
    #allocation3 [shape = 's32[1]{0}', space=sflag, size = 0x4, scoped, tag = 'scoped memory for tpu_custom_call.1']
    #allocation4 [shape = 's32[1]{0}', space=sflag, size = 0x4, scoped, tag = 'scoped memory for tpu_custom_call.1']
    #allocation5 [shape = 'u8[8192]{0}', space=vmem, size = 0x2000, scoped, tag = 'output window, operand 0, single buffered']
    %6 = vsyncpa [#allocation3], 0
    %7 = vsyncpa [#allocation4], 0
    // Predicated region
    $region2: #{tpu_custom_call.1} parent=1 // pred_check
      _
    $region3: #{tpu_custom_call.1} parent=1 // pred_check_branch
      %9 = sbr.rel (0) target = $region5
    $region4: #{tpu_custom_call.1} parent=1 // pred_region
      %11 = vsyncadd [#allocation3], 0
      %s12 = sshll.u32 %s0, 4
      %s13 = int_to_ptr.hbm [resolvable:$true] %s12
      %s14 = sshll.u32 [#allocation2], 4
      %s15 = int_to_ptr.vmem [resolvable:$true] %s14
      %20 = dma.hbm_to_vmem [thread:$0]  %s13, 256, %s15, [#allocation3], 128, 128, 8
    $region5: #{tpu_custom_call.1} parent=1 // pred_fallthru
      _
    // Predicated region
    $region6: #{tpu_custom_call.1} parent=1 // pred_check
      _
    $region7: #{tpu_custom_call.1} parent=1 // pred_check_branch
      %22 = sbr.rel (0) target = $region9
    $region8: #{tpu_custom_call.1} parent=1 // pred_region
      %24 = dma.done [#allocation3], 256
    $region9: #{tpu_custom_call.1} parent=1 // pred_fallthru
      _
    %v25 = vld [vmem:[#allocation2] sm:$0xff]
    %v26 = vld [vmem:[#allocation2 + $0x8] sm:$0xff]
    %v27 = vmul.f32 %v25, %v25
    %v28 = vmul.f32 %v26, %v26
    %31 = vst [vmem:[#allocation1] ss:$2 sm:$0xff] %v27
    %v32 = vld.sshfl [vmem:[#allocation1] sm:$0xff pattern:$0x75316420]
    %v33 = vld.sshfl [vmem:[#allocation1 + $0x8] sm:$0xff pattern:$0x75316420]
    %s34 = scalar_lea.vmem [#allocation1], 16
    %35 = vst [vmem:[%s34] ss:$2 sm:$0xff] %v28
    %v36 = vld.sshfl [vmem:[#allocation1 + $0x10] sm:$0xff pattern:$0x75316420]
    %v37 = vld.sshfl [vmem:[#allocation1 + $0x18] sm:$0xff pattern:$0x75316420]
    %vm42 = vcmask 1043456
    %v43 = vsel %vm42, %v32, 0.0
    %v44 = vrot.slane %v43, 4
    %v45 = vadd.f32 %v43, %v44
    %v46 = vrot.slane %v45, 2
    %v47 = vadd.f32 %v45, %v46
    %v48 = vrot.slane %v47, 1
    %v49 = vadd.f32 %v47, %v48
    %v50 = vsel %vm42, %v33, 0.0
    %v51 = vrot.slane %v50, 4
    %v52 = vadd.f32 %v50, %v51
    %v53 = vrot.slane %v52, 2
    %v54 = vadd.f32 %v52, %v53
    %v55 = vrot.slane %v54, 1
    %v56 = vadd.f32 %v54, %v55
    %v57 = vsel %vm42, %v36, 0.0
    %v58 = vrot.slane %v57, 4
    %v59 = vadd.f32 %v57, %v58
    %v60 = vrot.slane %v59, 2
    %v61 = vadd.f32 %v59, %v60
    %v62 = vrot.slane %v61, 1
    %v63 = vadd.f32 %v61, %v62
    %v64 = vsel %vm42, %v37, 0.0
    %v65 = vrot.slane %v64, 4
    %v66 = vadd.f32 %v64, %v65
    %v67 = vrot.slane %v66, 2
    %v68 = vadd.f32 %v66, %v67
    %v69 = vrot.slane %v68, 1
    %v70 = vadd.f32 %v68, %v69
    %v71 = vrsqrt.pop %v49
    %v72 = vmul.f32 %v71, %v49
    %v73 = vmul.f32 %v72, %v71
    %v74 = vmul.f32 0.5, %v73
    %v75 = vsub.f32 1.5, %v74
    %v76 = vmul.f32 %v71, %v75
    %vm77 = vweird.f32 %v49
    %vm78 = vweird.f32 %v71
    %vm79 = vmor %vm77, %vm78
    %v80 = vsel %vm79, %v71, %v76
    %v81 = vrsqrt.pop %v56
    %v82 = vmul.f32 %v81, %v56
    %v83 = vmul.f32 %v82, %v81
    %v84 = vmul.f32 0.5, %v83
    %v85 = vsub.f32 1.5, %v84
    %v86 = vmul.f32 %v81, %v85
    %vm87 = vweird.f32 %v56
    %vm88 = vweird.f32 %v81
    %vm89 = vmor %vm87, %vm88
    %v90 = vsel %vm89, %v81, %v86
    %v91 = vrsqrt.pop %v63
    %v92 = vmul.f32 %v91, %v63
    %v93 = vmul.f32 %v92, %v91
    %v94 = vmul.f32 0.5, %v93
    %v95 = vsub.f32 1.5, %v94
    %v96 = vmul.f32 %v91, %v95
    %vm97 = vweird.f32 %v63
    %vm98 = vweird.f32 %v91
    %vm99 = vmor %vm97, %vm98
    %v100 = vsel %vm99, %v91, %v96
    %v101 = vrsqrt.pop %v70
    %v102 = vmul.f32 %v101, %v70
    %v103 = vmul.f32 %v102, %v101
    %v104 = vmul.f32 0.5, %v103
    %v105 = vsub.f32 1.5, %v104
    %v106 = vmul.f32 %v101, %v105
    %vm107 = vweird.f32 %v70
    %vm108 = vweird.f32 %v101
    %vm109 = vmor %vm107, %vm108
    %v110 = vsel %vm109, %v101, %v106
    %v115 = vrot.slane %v90, 4
    %v116 = vrot.slane %v110, 4
    %v117 = vsel %vm42, %v80, %v115
    %v118 = vsel %vm42, %v100, %v116
    %v121 = vmul.f32 %v25, %v117
    %v122 = vmul.f32 %v26, %v118
    %123 = vst [vmem:[#allocation5] sm:$0xff] %v121
    %124 = vst [vmem:[#allocation5 + $0x8] sm:$0xff] %v122
    // Predicated region
    $region10: #{tpu_custom_call.1} parent=1 // pred_check
      _
    $region11: #{tpu_custom_call.1} parent=1 // pred_check_branch
      %126 = sbr.rel (0) target = $region13
    $region12: #{tpu_custom_call.1} parent=1 // pred_region
      %128 = vsyncadd [#allocation4], 0
      %s129 = sshll.u32 [#allocation5], 4
      %s130 = int_to_ptr.vmem [resolvable:$true] %s129
      %s131 = sshll.u32 %s1, 4
      %s132 = int_to_ptr.hbm [resolvable:$true] %s131
      %137 = dma.vmem_to_hbm [thread:$0]  %s130, 256, %s132, [#allocation4], 128, 128, 8
    $region13: #{tpu_custom_call.1} parent=1 // pred_fallthru
      _
    // Predicated region
    $region14: #{tpu_custom_call.1} parent=1 // pred_check
      _
    $region15: #{tpu_custom_call.1} parent=1 // pred_check_branch
      %139 = sbr.rel (0) target = $region17
    $region16: #{tpu_custom_call.1} parent=1 // pred_region
      %141 = dma.done [#allocation4], 256
    $region17: #{tpu_custom_call.1} parent=1 // pred_fallthru
      _
    %142 = vsyncpa [#allocation3], 1
    %143 = vsyncpa [#allocation4], 1

</llo_original>
